<compile_context>
chip_gen: v6e
topology: v6e:2x2x1
jax: 0.10.0
libtpu: 0.0.40
codegen_flags: <defaults>
</compile_context>

<pallas_src>
import functools
import math

import jax
import jax.numpy as jnp
from jax.experimental import pallas as pl
from jax.experimental.pallas import tpu as pltpu

_NEG_INF = -1e30  # finite "minus infinity" so masked/padded tiles never make NaNs


def _flash_attn_kernel(q_ref, k_ref, v_ref, *rest, needs_mask):
    """Online-softmax flash attention over precomputed Q/K/V tiles.

    refs: q (TQ, D), k (TKV, D), v (TKV, D), [bias (1, TKV)], o (TQ, D),
          scratch m (TQ, 1), l (TQ, 1), acc (TQ, D).
    """
    if needs_mask:
        bias_ref, o_ref, m_sc, l_sc, acc_sc = rest
    else:
        bias_ref = None
        o_ref, m_sc, l_sc, acc_sc = rest

    ki = pl.program_id(1)

    @pl.when(ki == 0)
    def _init():
        m_sc[...] = jnp.full_like(m_sc, _NEG_INF)
        l_sc[...] = jnp.zeros_like(l_sc)
        acc_sc[...] = jnp.zeros_like(acc_sc)

    # scores = (Q * scale) @ K^T without an explicit transpose: contract the last
    # dim of both operands.  Operands are in the caller-chosen dtype (bf16 in
    # production), accumulation is f32 on the MXU.
    s = jax.lax.dot_general(q_ref[...], k_ref[...], (((1,), (1,)), ((), ())),
                            preferred_element_type=jnp.float32)  # (TQ, TKV)

    if needs_mask:
        # Additive key-padding bias: 0 for valid keys, -1e30 for padded keys.
        # Interior kv tiles carry all-zero bias; a single broadcast vadd per
        # element replaces the old per-step iota + compare + select.
        s = s + bias_ref[...]

    # Online (flash) softmax update.
    m_prev = m_sc[...]
    m_new = jnp.maximum(m_prev, jnp.max(s, axis=-1, keepdims=True))
    alpha = jnp.exp(m_prev - m_new)
    p = jnp.exp(s - m_new)
    l_sc[...] = alpha * l_sc[...] + jnp.sum(p, axis=-1, keepdims=True)
    acc_sc[...] = alpha * acc_sc[...] + jnp.dot(
        p.astype(v_ref.dtype), v_ref[...], preferred_element_type=jnp.float32)
    m_sc[...] = m_new

    @pl.when(ki == pl.num_programs(1) - 1)
    def _finalize():
        # Exact divide: runs once per q-tile, so the approx reciprocal bought
        # nothing while loosening accuracy.
        o_ref[...] = (acc_sc[...] / l_sc[...]).astype(o_ref.dtype)


def _round_up(n, m):
    return ((n + m - 1) // m) * m


def self_attention_v1(x, w_query, w_key, w_value, *, block_q=256, block_kv=512,
                      operand_dtype=None, vmem_limit_bytes=48 * 1024 * 1024):
    """SelfAttentionV1 forward. x: (T, d_in); weights: (d_in, d_out) -> (T, d_out).

    operand_dtype: dtype of the attention-matmul operands (default: x.dtype, so
    bf16 inputs get bf16 MXU operands with f32 accumulation; pass jnp.bfloat16
    to force bf16 operands for f32 inputs).
    """
    T, d_in = x.shape
    d_out = w_query.shape[1]
    operand_dtype = x.dtype if operand_dtype is None else operand_dtype

    # Clamp tiles for short sequences so toy shapes don't over-pad; real
    # workloads keep the 256/512 defaults (v6e/v7x MXU is 256-wide; 512-deep kv
    # tiles amortize the ~0.35us/step overhead and hit ~85% of HBM roofline).
    max_tile = _round_up(T, 128)
    block_q = min(block_q, max_tile)
    block_kv = min(block_kv, max_tile)

    # Pad: sequence to a common multiple of both tiles, feature dims to 128
    # lanes (lane-dense stores, MXU-friendly contraction).  Zero padding is
    # exact for the projections; padded keys are neutralized via the bias row.
    t_pad = _round_up(T, math.lcm(block_q, block_kv))
    din_pad = _round_up(d_in, 128)
    dout_pad = _round_up(d_out, 128)

    x_p = jnp.pad(x, ((0, t_pad - T), (0, din_pad - d_in)))
    wq_p = jnp.pad(w_query, ((0, din_pad - d_in), (0, dout_pad - d_out)))
    wk_p = jnp.pad(w_key, ((0, din_pad - d_in), (0, dout_pad - d_out)))
    wv_p = jnp.pad(w_value, ((0, din_pad - d_in), (0, dout_pad - d_out)))

    # Hoisted projections: one pass over x (O(T*d_in*d_out)) instead of once per
    # q-tile inside the kernel.  The softmax scale (true d_out, as in the
    # PyTorch reference) is folded into W_query.  f32 accumulation, then cast to
    # the operand dtype so every in-kernel MXU matmul sees native-dtype operands.
    scale = 1.0 / (float(d_out) ** 0.5)
    q = jnp.dot(x_p, wq_p * scale, preferred_element_type=jnp.float32).astype(operand_dtype)
    k = jnp.dot(x_p, wk_p, preferred_element_type=jnp.float32).astype(operand_dtype)
    v = jnp.dot(x_p, wv_p, preferred_element_type=jnp.float32).astype(operand_dtype)

    n_q = t_pad // block_q
    n_kv = t_pad // block_kv
    needs_mask = t_pad != T  # static: mask path compiled out when no padding

    in_specs = [
        pl.BlockSpec((block_q, dout_pad), lambda qi, ki: (qi, 0)),   # Q tile
        pl.BlockSpec((block_kv, dout_pad), lambda qi, ki: (ki, 0)),  # K tile
        pl.BlockSpec((block_kv, dout_pad), lambda qi, ki: (ki, 0)),  # V tile
    ]
    args = [q, k, v]
    if needs_mask:
        bias = jnp.where(jnp.arange(t_pad) < T, 0.0, _NEG_INF).astype(jnp.float32)
        args.append(bias.reshape(1, t_pad))
        in_specs.append(pl.BlockSpec((1, block_kv), lambda qi, ki: (0, ki)))

    grid_spec = pltpu.PrefetchScalarGridSpec(
        num_scalar_prefetch=0,
        grid=(n_q, n_kv),
        in_specs=in_specs,
        out_specs=pl.BlockSpec((block_q, dout_pad), lambda qi, ki: (qi, 0)),
        scratch_shapes=[
            pltpu.VMEM((block_q, 1), jnp.float32),         # running max m
            pltpu.VMEM((block_q, 1), jnp.float32),         # running sum l
            pltpu.VMEM((block_q, dout_pad), jnp.float32),  # output accumulator
        ],
    )

    out_padded = pl.pallas_call(
        functools.partial(_flash_attn_kernel, needs_mask=needs_mask),
        grid_spec=grid_spec,
        out_shape=jax.ShapeDtypeStruct((t_pad, dout_pad), x.dtype),
        compiler_params=pltpu.CompilerParams(
            # q axis parallel -> shards q-tiles across both TCs on v7x;
            # kv axis is the sequential online-softmax reduction.
            dimension_semantics=("parallel", "arbitrary"),
            vmem_limit_bytes=vmem_limit_bytes),
    )(*args)

    return out_padded[:T, :d_out]


def self_attention_ref(x, w_query, w_key, w_value):
    """Pure-JAX reference mirroring the PyTorch forward."""
    keys = x @ w_key
    queries = x @ w_query
    values = x @ w_value
    attn_scores = queries @ keys.T
    attn_weights = jax.nn.softmax(attn_scores / (keys.shape[-1] ** 0.5), axis=-1)
    return attn_weights @ values


if __name__ == "__main__":
    # Small shapes consistent with the module: seq=8 tokens, d_in=32, d_out=16.
    T, D_IN, D_OUT = 8, 32, 16

    key = jax.random.PRNGKey(0)
    kx, kq, kk, kv = jax.random.split(key, 4)

    # torch.rand(...) -> uniform [0, 1)
    x = jax.random.uniform(kx, (T, D_IN), dtype=jnp.float32)
    w_query = jax.random.uniform(kq, (D_IN, D_OUT), dtype=jnp.float32)
    w_key = jax.random.uniform(kk, (D_IN, D_OUT), dtype=jnp.float32)
    w_value = jax.random.uniform(kv, (D_IN, D_OUT), dtype=jnp.float32)

    out = jax.block_until_ready(self_attention_v1(x, w_query, w_key, w_value))
    ref = self_attention_ref(x, w_query, w_key, w_value)
    assert out.shape == (T, D_OUT), out.shape
    assert jnp.allclose(out, ref, atol=5e-3, rtol=5e-3), "mismatch vs reference (toy)"

    # Second check: multi-tile grid (2x2) exercising the online-softmax carry
    # across kv steps and the key-padding bias on a partially padded tile.
    T2, D_IN2, D_OUT2 = 200, 64, 32
    k2 = jax.random.split(jax.random.PRNGKey(1), 4)
    x2 = jax.random.uniform(k2[0], (T2, D_IN2), dtype=jnp.float32)
    wq2 = jax.random.uniform(k2[1], (D_IN2, D_OUT2), dtype=jnp.float32)
    wk2 = jax.random.uniform(k2[2], (D_IN2, D_OUT2), dtype=jnp.float32)
    wv2 = jax.random.uniform(k2[3], (D_IN2, D_OUT2), dtype=jnp.float32)
    out2 = jax.block_until_ready(
        self_attention_v1(x2, wq2, wk2, wv2, block_q=128, block_kv=128))
    ref2 = self_attention_ref(x2, wq2, wk2, wv2)
    assert jnp.allclose(out2, ref2, atol=5e-3, rtol=5e-3), "mismatch vs reference (tiled)"

    print("KERNEL_OK")
</pallas_src>

<mosaic_0001>
module attributes {stable_mosaic.version = 11 : i64} {
  func.func @_flash_attn_kernel(%arg0: i32, %arg1: i32, %arg2: memref<128x128xf32, #tpu.memory_space<vmem>>, %arg3: memref<128x128xf32, #tpu.memory_space<vmem>>, %arg4: memref<128x128xf32, #tpu.memory_space<vmem>>, %arg5: memref<1x128xf32, #tpu.memory_space<vmem>>, %arg6: memref<128x128xf32, #tpu.memory_space<vmem>>, %arg7: memref<128x1xf32, #tpu.memory_space<vmem>>, %arg8: memref<128x1xf32, #tpu.memory_space<vmem>>, %arg9: memref<128x128xf32, #tpu.memory_space<vmem>>) attributes {dimension_semantics = [#tpu.dimension_semantics<parallel>, #tpu.dimension_semantics<arbitrary>], iteration_bounds = array<i64: 1, 1>, scalar_prefetch = 0 : i64, scratch_operands = 3 : i64, tpu.core_type = #tpu.core_type<tc>, window_params = [{transform_indices = @transform_0, window_bounds = array<i64: 128, 128>}, {transform_indices = @transform_1, window_bounds = array<i64: 128, 128>}, {transform_indices = @transform_2, window_bounds = array<i64: 128, 128>}, {transform_indices = @transform_3, window_bounds = array<i64: 1, 128>}, {transform_indices = @transform_4, window_bounds = array<i64: 128, 128>}]} {
    %c0_i32 = arith.constant 0 : i32
    %0 = arith.cmpi eq, %arg1, %c0_i32 : i32
    %1 = arith.extui %0 : i1 to i32
    %c0_i32_0 = arith.constant 0 : i32
    %2 = arith.cmpi ne, %1, %c0_i32_0 : i32
    scf.if %2 {
      %cst_25 = arith.constant -1.000000e+30 : f32
      %35 = vector.broadcast %cst_25 : f32 to vector<128x1xf32>
      %c0_26 = arith.constant 0 : index
      %c0_27 = arith.constant 0 : index
      %36 = vector.load %arg7[%c0_26, %c0_27] : memref<128x1xf32, #tpu.memory_space<vmem>>, vector<128x1xf32>
      tpu.vector_store %arg7[%c0_26, %c0_27], %35 {strides = array<i32>} : memref<128x1xf32, #tpu.memory_space<vmem>>, vector<128x1xf32>,
      %cst_28 = arith.constant 0.000000e+00 : f32
      %37 = vector.broadcast %cst_28 : f32 to vector<128x1xf32>
      %c0_29 = arith.constant 0 : index
      %c0_30 = arith.constant 0 : index
      %38 = vector.load %arg8[%c0_29, %c0_30] : memref<128x1xf32, #tpu.memory_space<vmem>>, vector<128x1xf32>
      tpu.vector_store %arg8[%c0_29, %c0_30], %37 {strides = array<i32>} : memref<128x1xf32, #tpu.memory_space<vmem>>, vector<128x1xf32>,
      %cst_31 = arith.constant 0.000000e+00 : f32
      %39 = vector.broadcast %cst_31 : f32 to vector<128x128xf32>
      %c0_32 = arith.constant 0 : index
      %c0_33 = arith.constant 0 : index
      %40 = vector.load %arg9[%c0_32, %c0_33] : memref<128x128xf32, #tpu.memory_space<vmem>>, vector<128x128xf32>
      tpu.vector_store %arg9[%c0_32, %c0_33], %39 {strides = array<i32>} : memref<128x128xf32, #tpu.memory_space<vmem>>, vector<128x128xf32>,
    } else {
    }
    %c0 = arith.constant 0 : index
    %c0_1 = arith.constant 0 : index
    %3 = vector.load %arg2[%c0, %c0_1] : memref<128x128xf32, #tpu.memory_space<vmem>>, vector<128x128xf32>
    %c0_2 = arith.constant 0 : index
    %c0_3 = arith.constant 0 : index
    %4 = vector.load %arg3[%c0_2, %c0_3] : memref<128x128xf32, #tpu.memory_space<vmem>>, vector<128x128xf32>
    %cst = arith.constant dense<0.000000e+00> : vector<128x128xf32>
    %5 = tpu.matmul %3, %4, %cst {dimension_numbers = #tpu.dot_dimension_numbers<[1], [1], [0], [0], [0, 0, 1, 0], [], []>} : vector<128x128xf32>, vector<128x128xf32>, vector<128x128xf32> -> vector<128x128xf32>
    %c0_4 = arith.constant 0 : index
    %c0_5 = arith.constant 0 : index
    %6 = vector.load %arg5[%c0_4, %c0_5] : memref<1x128xf32, #tpu.memory_space<vmem>>, vector<1x128xf32>
    %7 = vector.broadcast %6 : vector<1x128xf32> to vector<128x128xf32>
    %8 = arith.addf %5, %7 : vector<128x128xf32>
    %c0_6 = arith.constant 0 : index
    %c0_7 = arith.constant 0 : index
    %9 = vector.load %arg7[%c0_6, %c0_7] : memref<128x1xf32, #tpu.memory_space<vmem>>, vector<128x1xf32>
    %cst_8 = arith.constant dense<0xFF800000> : vector<128xf32>
    %10 = vector.multi_reduction <maximumf>, %8, %cst_8 [1] : vector<128x128xf32> to vector<128xf32>
    %11 = vector.shape_cast %10 : vector<128xf32> to vector<128x1xf32>
    %12 = arith.maximumf %9, %11 : vector<128x1xf32>
    %13 = arith.subf %9, %12 : vector<128x1xf32>
    %14 = math.exp %13 : vector<128x1xf32>
    %15 = vector.broadcast %12 : vector<128x1xf32> to vector<128x128xf32>
    %16 = arith.subf %8, %15 : vector<128x128xf32>
    %17 = math.exp %16 : vector<128x128xf32>
    %c0_9 = arith.constant 0 : index
    %c0_10 = arith.constant 0 : index
    %18 = vector.load %arg8[%c0_9, %c0_10] : memref<128x1xf32, #tpu.memory_space<vmem>>, vector<128x1xf32>
    %19 = arith.mulf %14, %18 : vector<128x1xf32>
    %cst_11 = arith.constant dense<0.000000e+00> : vector<128xf32>
    %20 = vector.multi_reduction <add>, %17, %cst_11 [1] : vector<128x128xf32> to vector<128xf32>
    %21 = vector.shape_cast %20 : vector<128xf32> to vector<128x1xf32>
    %22 = arith.addf %19, %21 : vector<128x1xf32>
    %c0_12 = arith.constant 0 : index
    %c0_13 = arith.constant 0 : index
    %23 = vector.load %arg8[%c0_12, %c0_13] : memref<128x1xf32, #tpu.memory_space<vmem>>, vector<128x1xf32>
    tpu.vector_store %arg8[%c0_12, %c0_13], %22 {strides = array<i32>} : memref<128x1xf32, #tpu.memory_space<vmem>>, vector<128x1xf32>,
    %c0_14 = arith.constant 0 : index
    %c0_15 = arith.constant 0 : index
    %24 = vector.load %arg9[%c0_14, %c0_15] : memref<128x128xf32, #tpu.memory_space<vmem>>, vector<128x128xf32>
    %25 = vector.broadcast %14 : vector<128x1xf32> to vector<128x128xf32>
    %26 = arith.mulf %25, %24 : vector<128x128xf32>
    %c0_16 = arith.constant 0 : index
    %c0_17 = arith.constant 0 : index
    %27 = vector.load %arg4[%c0_16, %c0_17] : memref<128x128xf32, #tpu.memory_space<vmem>>, vector<128x128xf32>
    %cst_18 = arith.constant dense<0.000000e+00> : vector<128x128xf32>
    %28 = tpu.matmul %17, %27, %cst_18 {dimension_numbers = #tpu.dot_dimension_numbers<[1], [0], [0], [1], [0, 0, 1, 1], [], []>} : vector<128x128xf32>, vector<128x128xf32>, vector<128x128xf32> -> vector<128x128xf32>
    %29 = arith.addf %26, %28 : vector<128x128xf32>
    %c0_19 = arith.constant 0 : index
    %c0_20 = arith.constant 0 : index
    %30 = vector.load %arg9[%c0_19, %c0_20] : memref<128x128xf32, #tpu.memory_space<vmem>>, vector<128x128xf32>
    tpu.vector_store %arg9[%c0_19, %c0_20], %29 {strides = array<i32>} : memref<128x128xf32, #tpu.memory_space<vmem>>, vector<128x128xf32>,
    %c0_21 = arith.constant 0 : index
    %c0_22 = arith.constant 0 : index
    %31 = vector.load %arg7[%c0_21, %c0_22] : memref<128x1xf32, #tpu.memory_space<vmem>>, vector<128x1xf32>
    tpu.vector_store %arg7[%c0_21, %c0_22], %12 {strides = array<i32>} : memref<128x1xf32, #tpu.memory_space<vmem>>, vector<128x1xf32>,
    %c0_i32_23 = arith.constant 0 : i32
    %32 = arith.cmpi eq, %arg1, %c0_i32_23 : i32
    %33 = arith.extui %32 : i1 to i32
    %c0_i32_24 = arith.constant 0 : i32
    %34 = arith.cmpi ne, %33, %c0_i32_24 : i32
    scf.if %34 {
      %c0_25 = arith.constant 0 : index
      %c0_26 = arith.constant 0 : index
      %35 = vector.load %arg9[%c0_25, %c0_26] : memref<128x128xf32, #tpu.memory_space<vmem>>, vector<128x128xf32>
      %c0_27 = arith.constant 0 : index
      %c0_28 = arith.constant 0 : index
      %36 = vector.load %arg8[%c0_27, %c0_28] : memref<128x1xf32, #tpu.memory_space<vmem>>, vector<128x1xf32>
      %37 = vector.broadcast %36 : vector<128x1xf32> to vector<128x128xf32>
      %38 = arith.divf %35, %37 : vector<128x128xf32>
      %c0_29 = arith.constant 0 : index
      %c0_30 = arith.constant 0 : index
      %39 = vector.load %arg6[%c0_29, %c0_30] : memref<128x128xf32, #tpu.memory_space<vmem>>, vector<128x128xf32>
      tpu.vector_store %arg6[%c0_29, %c0_30], %38 {strides = array<i32>} : memref<128x128xf32, #tpu.memory_space<vmem>>, vector<128x128xf32>,
    } else {
    }
    return
  }
  func.func @transform_0(%arg0: i32, %arg1: i32) -> (i32, i32) {
    %c0_i32 = arith.constant 0 : i32
    %c0_i32_0 = arith.constant 0 : i32
    return %arg0, %c0_i32 : i32, i32
  }
  func.func @transform_1(%arg0: i32, %arg1: i32) -> (i32, i32) {
    %c0_i32 = arith.constant 0 : i32
    %c0_i32_0 = arith.constant 0 : i32
    return %arg1, %c0_i32 : i32, i32
  }
  func.func @transform_2(%arg0: i32, %arg1: i32) -> (i32, i32) {
    %c0_i32 = arith.constant 0 : i32
    %c0_i32_0 = arith.constant 0 : i32
    return %arg1, %c0_i32 : i32, i32
  }
  func.func @transform_3(%arg0: i32, %arg1: i32) -> (i32, i32) {
    %c0_i32 = arith.constant 0 : i32
    %c0_i32_0 = arith.constant 0 : i32
    return %c0_i32, %arg1 : i32, i32
  }
  func.func @transform_4(%arg0: i32, %arg1: i32) -> (i32, i32) {
    %c0_i32 = arith.constant 0 : i32
    %c0_i32_0 = arith.constant 0 : i32
    return %arg0, %c0_i32 : i32, i32
  }
}

</mosaic_0001>

<llo_original>
// kernel: tpu_custom_call.1
$region0: #{tpu_custom_call.1}
  #allocation0 [shape = 'u32[]', space=smem, size = 0x4, offset = 0x4, fixed_abs, tag = 'smem constant byte address 0x4 - core index']
  #allocation1 [shape = 'u32[144,128]{1,0:T(1,128)}', space=vmem, size = 0x12000, scoped, tag = 'internal scratch']
  #allocation2 [shape = 'f32[128,1]{1,0:T(8,128)}', space=vmem, size = 0x10000, scoped, tag = 'scratch operand']
  #allocation3 [shape = 'f32[128,1]{1,0:T(8,128)}', space=vmem, size = 0x10000, scoped, tag = 'scratch operand']
  #allocation4 [shape = 'f32[128,128]{1,0:T(8,128)}', space=vmem, size = 0x10000, scoped, tag = 'scratch operand']
  %s0 = inlined_call_operand.hbm [shape: f32[128,128], index: 0, kind: input, shape index: {}]
  %s1 = inlined_call_operand.hbm [shape: f32[128,128], index: 1, kind: input, shape index: {}]
  %s2 = inlined_call_operand.hbm [shape: f32[128,128], index: 2, kind: input, shape index: {}]
  %s3 = inlined_call_operand.vmem [shape: f32[1,128], index: 3, kind: input, shape index: {}]
  %s4 = inlined_call_operand.hbm [shape: f32[128,128], index: 4, kind: output, shape index: {}]
  %s5 = sld [smem:[#allocation0]]
  $region46: #{tpu_custom_call.1} parent=0
    _
  %s7 = ssub.s32 1, %s5
  %s8 = scalar_select 0, %s7, %s5
  $region1: #{tpu_custom_call.1} parent=0
    #allocation5 [shape = 'u8[65536]{0}', space=vmem, size = 0x10000, scoped, tag = 'input window, operand 0, single buffered']
    #allocation6 [shape = 's32[1]{0}', space=sflag, size = 0x4, scoped, tag = 'scoped memory for tpu_custom_call.1']
    #allocation7 [shape = 's32[1]{0}', space=sflag, size = 0x4, scoped, tag = 'scoped memory for tpu_custom_call.1']
    #allocation8 [shape = 'u8[65536]{0}', space=vmem, size = 0x10000, scoped, tag = 'input window, operand 1, single buffered']
    #allocation9 [shape = 's32[1]{0}', space=sflag, size = 0x4, scoped, tag = 'scoped memory for tpu_custom_call.1']
    #allocation10 [shape = 'u8[65536]{0}', space=vmem, size = 0x10000, scoped, tag = 'input window, operand 2, single buffered']
    #allocation11 [shape = 'u8[65536]{0}', space=vmem, size = 0x10000, scoped, tag = 'output window, operand 0, single buffered']
    %9 = vsyncpa [#allocation6], 0
    %10 = vsyncpa [#allocation9], 0
    %11 = vsyncpa [#allocation7], 0
    // Predicated region
    $region2: #{tpu_custom_call.1} parent=1 // pred_check
      _
    $region3: #{tpu_custom_call.1} parent=1 // pred_check_branch
      %13 = sbr.rel (0) target = $region5
    $region4: #{tpu_custom_call.1} parent=1 // pred_region
      %s15 = ssub.s32 2048, 2048
      %16 = vsyncadd [#allocation6], %s15
      %s17 = sshll.u32 [#allocation5], 4
      %s18 = int_to_ptr.vmem [resolvable:$true] %s17
      %23 = dma.hbm_to_vmem [thread:$0]  %s0, 2048, %s18, [#allocation6], 128, 128, 8
    $region5: #{tpu_custom_call.1} parent=1 // pred_fallthru
      _
    // Predicated region
    $region6: #{tpu_custom_call.1} parent=1 // pred_check
      _
    $region7: #{tpu_custom_call.1} parent=1 // pred_check_branch
      %25 = sbr.rel (0) target = $region9
    $region8: #{tpu_custom_call.1} parent=1 // pred_region
      %s27 = ssub.s32 2048, 2048
      %28 = vsyncadd [#allocation9], %s27
      %s29 = sshll.u32 [#allocation8], 4
      %s30 = int_to_ptr.vmem [resolvable:$true] %s29
      %35 = dma.hbm_to_vmem [thread:$0]  %s1, 2048, %s30, [#allocation9], 128, 128, 8
    $region9: #{tpu_custom_call.1} parent=1 // pred_fallthru
      _
    // Predicated region
    $region10: #{tpu_custom_call.1} parent=1 // pred_check
      _
    $region11: #{tpu_custom_call.1} parent=1 // pred_check_branch
      %37 = sbr.rel (0) target = $region13
    $region12: #{tpu_custom_call.1} parent=1 // pred_region
      %s39 = ssub.s32 2048, 2048
      %40 = vsyncadd [#allocation9], %s39
      %s41 = sshll.u32 [#allocation10], 4
      %s42 = int_to_ptr.vmem [resolvable:$true] %s41
      %47 = dma.hbm_to_vmem [thread:$0]  %s2, 2048, %s42, [#allocation9], 128, 128, 8
    $region13: #{tpu_custom_call.1} parent=1 // pred_fallthru
      _
    // Predicated region
    $region14: #{tpu_custom_call.1} parent=1 // pred_check
      _
    $region15: #{tpu_custom_call.1} parent=1 // pred_check_branch
      %49 = sbr.rel (0) target = $region17
    $region16: #{tpu_custom_call.1} parent=1 // pred_region
      _
    $region17: #{tpu_custom_call.1} parent=1 // pred_fallthru
      _
    // Predicated region
    $region18: #{tpu_custom_call.1} parent=1 // pred_check
      _
    $region19: #{tpu_custom_call.1} parent=1 // pred_check_branch
      %51 = sbr.rel (0) target = $region21
    $region20: #{tpu_custom_call.1} parent=1 // pred_region
      %52 = dma.done [#allocation6], 2048
    $region21: #{tpu_custom_call.1} parent=1 // pred_fallthru
      _
    // Predicated region
    $region22: #{tpu_custom_call.1} parent=1 // pred_check
      _
    $region23: #{tpu_custom_call.1} parent=1 // pred_check_branch
      %54 = sbr.rel (0) target = $region25
    $region24: #{tpu_custom_call.1} parent=1 // pred_region
      %55 = dma.done [#allocation9], 2048
    $region25: #{tpu_custom_call.1} parent=1 // pred_fallthru
      _
    // Predicated region
    $region26: #{tpu_custom_call.1} parent=1 // pred_check
      _
    $region27: #{tpu_custom_call.1} parent=1 // pred_check_branch
      %57 = sbr.rel (0) target = $region29
    $region28: #{tpu_custom_call.1} parent=1 // pred_region
      %58 = dma.done [#allocation9], 2048
    $region29: #{tpu_custom_call.1} parent=1 // pred_fallthru
      _
    %p59 = scmp.eq.s32.totalorder 0, 0
    // Predicated region
    $region30: #{tpu_custom_call.1} parent=1 // pred_check
      %p60 = pneg %p59
    $region31: #{tpu_custom_call.1} parent=1 // pred_check_branch
      %62 = sbr.rel (%p60) target = $region33
    $region32: #{tpu_custom_call.1} parent=1 // pred_region
      %vm63 = vcmask 7168
      %64 = vst.msk [vmem:[#allocation2] sm:$0xff] %vm63, -1e+30
      %65 = vst.msk [vmem:[#allocation2 + $0x8] sm:$0xff] %vm63, -1e+30
      %66 = vst.msk [vmem:[#allocation2 + $0x10] sm:$0xff] %vm63, -1e+30
      %67 = vst.msk [vmem:[#allocation2 + $0x18] sm:$0xff] %vm63, -1e+30
      %68 = vst.msk [vmem:[#allocation2 + $0x20] sm:$0xff] %vm63, -1e+30
      %69 = vst.msk [vmem:[#allocation2 + $0x28] sm:$0xff] %vm63, -1e+30
      %70 = vst.msk [vmem:[#allocation2 + $0x30] sm:$0xff] %vm63, -1e+30
      %71 = vst.msk [vmem:[#allocation2 + $0x38] sm:$0xff] %vm63, -1e+30
      %72 = vst.msk [vmem:[#allocation2 + $0x40] sm:$0xff] %vm63, -1e+30
      %73 = vst.msk [vmem:[#allocation2 + $0x48] sm:$0xff] %vm63, -1e+30
      %74 = vst.msk [vmem:[#allocation2 + $0x50] sm:$0xff] %vm63, -1e+30
      %75 = vst.msk [vmem:[#allocation2 + $0x58] sm:$0xff] %vm63, -1e+30
      %76 = vst.msk [vmem:[#allocation2 + $0x60] sm:$0xff] %vm63, -1e+30
      %77 = vst.msk [vmem:[#allocation2 + $0x68] sm:$0xff] %vm63, -1e+30
      %78 = vst.msk [vmem:[#allocation2 + $0x70] sm:$0xff] %vm63, -1e+30
      %79 = vst.msk [vmem:[#allocation2 + $0x78] sm:$0xff] %vm63, -1e+30
      %80 = vst.msk [vmem:[#allocation3] sm:$0xff] %vm63, 0.0
      %81 = vst.msk [vmem:[#allocation3 + $0x8] sm:$0xff] %vm63, 0.0
      %82 = vst.msk [vmem:[#allocation3 + $0x10] sm:$0xff] %vm63, 0.0
      %83 = vst.msk [vmem:[#allocation3 + $0x18] sm:$0xff] %vm63, 0.0
      %84 = vst.msk [vmem:[#allocation3 + $0x20] sm:$0xff] %vm63, 0.0
      %85 = vst.msk [vmem:[#allocation3 + $0x28] sm:$0xff] %vm63, 0.0
      %86 = vst.msk [vmem:[#allocation3 + $0x30] sm:$0xff] %vm63, 0.0
      %87 = vst.msk [vmem:[#allocation3 + $0x38] sm:$0xff] %vm63, 0.0
      %88 = vst.msk [vmem:[#allocation3 + $0x40] sm:$0xff] %vm63, 0.0
      %89 = vst.msk [vmem:[#allocation3 + $0x48] sm:$0xff] %vm63, 0.0
      %90 = vst.msk [vmem:[#allocation3 + $0x50] sm:$0xff] %vm63, 0.0
      %91 = vst.msk [vmem:[#allocation3 + $0x58] sm:$0xff] %vm63, 0.0
      %92 = vst.msk [vmem:[#allocation3 + $0x60] sm:$0xff] %vm63, 0.0
      %93 = vst.msk [vmem:[#allocation3 + $0x68] sm:$0xff] %vm63, 0.0
      %94 = vst.msk [vmem:[#allocation3 + $0x70] sm:$0xff] %vm63, 0.0
      %95 = vst.msk [vmem:[#allocation3 + $0x78] sm:$0xff] %vm63, 0.0
      %96 = vst [vmem:[#allocation4] sm:$0xff] 0.0
      %97 = vst [vmem:[#allocation4 + $0x8] sm:$0xff] 0.0
      %98 = vst [vmem:[#allocation4 + $0x10] sm:$0xff] 0.0
      %99 = vst [vmem:[#allocation4 + $0x18] sm:$0xff] 0.0
      %100 = vst [vmem:[#allocation4 + $0x20] sm:$0xff] 0.0
      %101 = vst [vmem:[#allocation4 + $0x28] sm:$0xff] 0.0
      %102 = vst [vmem:[#allocation4 + $0x30] sm:$0xff] 0.0
      %103 = vst [vmem:[#allocation4 + $0x38] sm:$0xff] 0.0
      %104 = vst [vmem:[#allocation4 + $0x40] sm:$0xff] 0.0
      %105 = vst [vmem:[#allocation4 + $0x48] sm:$0xff] 0.0
      %106 = vst [vmem:[#allocation4 + $0x50] sm:$0xff] 0.0
      %107 = vst [vmem:[#allocation4 + $0x58] sm:$0xff] 0.0
      %108 = vst [vmem:[#allocation4 + $0x60] sm:$0xff] 0.0
      %109 = vst [vmem:[#allocation4 + $0x68] sm:$0xff] 0.0
      %110 = vst [vmem:[#allocation4 + $0x70] sm:$0xff] 0.0
      %111 = vst [vmem:[#allocation4 + $0x78] sm:$0xff] 0.0
    $region33: #{tpu_custom_call.1} parent=1 // pred_fallthru
      _
    %v112 = vld [vmem:[#allocation5] sm:$0xff]
    %v113 = vld [vmem:[#allocation5 + $0x8] sm:$0xff]
    %v114 = vld [vmem:[#allocation5 + $0x10] sm:$0xff]
    %v115 = vld [vmem:[#allocation5 + $0x18] sm:$0xff]
    %v116 = vld [vmem:[#allocation5 + $0x20] sm:$0xff]
    %v117 = vld [vmem:[#allocation5 + $0x28] sm:$0xff]
    %v118 = vld [vmem:[#allocation5 + $0x30] sm:$0xff]
    %v119 = vld [vmem:[#allocation5 + $0x38] sm:$0xff]
    %v120 = vld [vmem:[#allocation5 + $0x40] sm:$0xff]
    %v121 = vld [vmem:[#allocation5 + $0x48] sm:$0xff]
    %v122 = vld [vmem:[#allocation5 + $0x50] sm:$0xff]
    %v123 = vld [vmem:[#allocation5 + $0x58] sm:$0xff]
    %v124 = vld [vmem:[#allocation5 + $0x60] sm:$0xff]
    %v125 = vld [vmem:[#allocation5 + $0x68] sm:$0xff]
    %v126 = vld [vmem:[#allocation5 + $0x70] sm:$0xff]
    %v127 = vld [vmem:[#allocation5 + $0x78] sm:$0xff]
    %v128 = vld [vmem:[#allocation8] sm:$0xff]
    %v129 = vld [vmem:[#allocation8 + $0x8] sm:$0xff]
    %v130 = vld [vmem:[#allocation8 + $0x10] sm:$0xff]
    %v131 = vld [vmem:[#allocation8 + $0x18] sm:$0xff]
    %v132 = vld [vmem:[#allocation8 + $0x20] sm:$0xff]
    %v133 = vld [vmem:[#allocation8 + $0x28] sm:$0xff]
    %v134 = vld [vmem:[#allocation8 + $0x30] sm:$0xff]
    %v135 = vld [vmem:[#allocation8 + $0x38] sm:$0xff]
    %v136 = vld [vmem:[#allocation8 + $0x40] sm:$0xff]
    %v137 = vld [vmem:[#allocation8 + $0x48] sm:$0xff]
    %v138 = vld [vmem:[#allocation8 + $0x50] sm:$0xff]
    %v139 = vld [vmem:[#allocation8 + $0x58] sm:$0xff]
    %v140 = vld [vmem:[#allocation8 + $0x60] sm:$0xff]
    %v141 = vld [vmem:[#allocation8 + $0x68] sm:$0xff]
    %v142 = vld [vmem:[#allocation8 + $0x70] sm:$0xff]
    %v143 = vld [vmem:[#allocation8 + $0x78] sm:$0xff]
    %v144 = vld [vmem:[%s3] sm:$0x1]
    %v146 = vlaneseq
    %v147 = vshrl.u32 %v146, 7
    %v148 = vsub.s32 0, %v147
    %v149 = vrot.slane %v144, %v148
    %151 = vmatprep.subr.mxu0 0.0
    %152 = vmatpush1.xpose.msra.mxu0 %v143
    %153 = vmatprep.subr.mxu0 0.0
    %154 = vmatpush1.xpose.msra.mxu0 %v142
    %155 = vmatprep.subr.mxu0 0.0
    %156 = vmatpush1.xpose.msra.mxu0 %v141
    %157 = vmatprep.subr.mxu0 0.0
    %158 = vmatpush1.xpose.msra.mxu0 %v140
    %159 = vmatprep.subr.mxu0 0.0
    %160 = vmatpush1.xpose.msra.mxu0 %v139
    %161 = vmatprep.subr.mxu0 0.0
    %162 = vmatpush1.xpose.msra.mxu0 %v138
    %163 = vmatprep.subr.mxu0 0.0
    %164 = vmatpush1.xpose.msra.mxu0 %v137
    %165 = vmatprep.subr.mxu0 0.0
    %166 = vmatpush1.xpose.msra.mxu0 %v136
    %167 = vmatprep.subr.mxu0 0.0
    %168 = vmatpush1.xpose.msra.mxu0 %v135
    %169 = vmatprep.subr.mxu0 0.0
    %170 = vmatpush1.xpose.msra.mxu0 %v134
    %171 = vmatprep.subr.mxu0 0.0
    %172 = vmatpush1.xpose.msra.mxu0 %v133
    %173 = vmatprep.subr.mxu0 0.0
    %174 = vmatpush1.xpose.msra.mxu0 %v132
    %175 = vmatprep.subr.mxu0 0.0
    %176 = vmatpush1.xpose.msra.mxu0 %v131
    %177 = vmatprep.subr.mxu0 0.0
    %178 = vmatpush1.xpose.msra.mxu0 %v130
    %179 = vmatprep.subr.mxu0 0.0
    %180 = vmatpush1.xpose.msra.mxu0 %v129
    %181 = vmatprep.subr.mxu0 0.0
    %182 = vmatpush1.xpose.msra.mxu0 %v128
    %183 = vmatprep.subr.mxu0 0.0
    %184 = vmatpush2.xpose.msra.mxu0 0.0
    %185 = vmatprep.subr.mxu0 0.0
    %186 = vmatpush2.xpose.msra.mxu0 0.0
    %187 = vmatprep.subr.mxu0 0.0
    %188 = vmatpush2.xpose.msra.mxu0 0.0
    %189 = vmatprep.subr.mxu0 0.0
    %190 = vmatpush2.xpose.msra.mxu0 0.0
    %191 = vmatprep.subr.mxu0 0.0
    %192 = vmatpush2.xpose.msra.mxu0 0.0
    %193 = vmatprep.subr.mxu0 0.0
    %194 = vmatpush2.xpose.msra.mxu0 0.0
    %195 = vmatprep.subr.mxu0 0.0
    %196 = vmatpush2.xpose.msra.mxu0 0.0
    %197 = vmatprep.subr.mxu0 0.0
    %198 = vmatpush2.xpose.msra.mxu0 0.0
    %199 = vmatprep.subr.mxu0 0.0
    %200 = vmatpush2.xpose.msra.mxu0 0.0
    %201 = vmatprep.subr.mxu0 0.0
    %202 = vmatpush2.xpose.msra.mxu0 0.0
    %203 = vmatprep.subr.mxu0 0.0
    %204 = vmatpush2.xpose.msra.mxu0 0.0
    %205 = vmatprep.subr.mxu0 0.0
    %206 = vmatpush2.xpose.msra.mxu0 0.0
    %207 = vmatprep.subr.mxu0 0.0
    %208 = vmatpush2.xpose.msra.mxu0 0.0
    %209 = vmatprep.subr.mxu0 0.0
    %210 = vmatpush2.xpose.msra.mxu0 0.0
    %211 = vmatprep.subr.mxu0 0.0
    %212 = vmatpush2.xpose.msra.mxu0 0.0
    %213 = vmatprep.subr.mxu0 0.0
    %214 = vmatpush2.xpose.msra.mxu0 0.0
    %215 = vmatprep.mubr.f32.mxu0 0.0
    %216 = vmatmul.mubr.f32.gmra.mxu0 %v112
    %v217 = vpop.f32.mrf.mxu0
    %v218 = vadd.f32 %v149, %v217
    %v219 = vpop.f32.mrf.mxu0
    %220 = vmatprep.mubr.f32.mxu0 0.0
    %221 = vmatmul.mubr.f32.gmra.mxu0 %v113
    %v222 = vpop.f32.mrf.mxu0
    %v223 = vadd.f32 %v149, %v222
    %v224 = vpop.f32.mrf.mxu0
    %225 = vmatprep.mubr.f32.mxu0 0.0
    %226 = vmatmul.mubr.f32.gmra.mxu0 %v114
    %v227 = vpop.f32.mrf.mxu0
    %v228 = vadd.f32 %v149, %v227
    %v229 = vpop.f32.mrf.mxu0
    %230 = vmatprep.mubr.f32.mxu0 0.0
    %231 = vmatmul.mubr.f32.gmra.mxu0 %v115
    %v232 = vpop.f32.mrf.mxu0
    %v233 = vadd.f32 %v149, %v232
    %v234 = vpop.f32.mrf.mxu0
    %235 = vmatprep.mubr.f32.mxu0 0.0
    %236 = vmatmul.mubr.f32.gmra.mxu0 %v116
    %v237 = vpop.f32.mrf.mxu0
    %v238 = vadd.f32 %v149, %v237
    %v239 = vpop.f32.mrf.mxu0
    %240 = vmatprep.mubr.f32.mxu0 0.0
    %241 = vmatmul.mubr.f32.gmra.mxu0 %v117
    %v242 = vpop.f32.mrf.mxu0
    %v243 = vadd.f32 %v149, %v242
    %v244 = vpop.f32.mrf.mxu0
    %245 = vmatprep.mubr.f32.mxu0 0.0
    %246 = vmatmul.mubr.f32.gmra.mxu0 %v118
    %v247 = vpop.f32.mrf.mxu0
    %v248 = vadd.f32 %v149, %v247
    %v249 = vpop.f32.mrf.mxu0
    %250 = vmatprep.mubr.f32.mxu0 0.0
    %251 = vmatmul.mubr.f32.gmra.mxu0 %v119
    %v252 = vpop.f32.mrf.mxu0
    %v253 = vadd.f32 %v149, %v252
    %v254 = vpop.f32.mrf.mxu0
    %255 = vmatprep.mubr.f32.mxu0 0.0
    %256 = vmatmul.mubr.f32.gmra.mxu0 %v120
    %v257 = vpop.f32.mrf.mxu0
    %v258 = vadd.f32 %v149, %v257
    %v259 = vpop.f32.mrf.mxu0
    %260 = vmatprep.mubr.f32.mxu0 0.0
    %261 = vmatmul.mubr.f32.gmra.mxu0 %v121
    %v262 = vpop.f32.mrf.mxu0
    %v263 = vadd.f32 %v149, %v262
    %v264 = vpop.f32.mrf.mxu0
    %265 = vmatprep.mubr.f32.mxu0 0.0
    %266 = vmatmul.mubr.f32.gmra.mxu0 %v122
    %v267 = vpop.f32.mrf.mxu0
    %v268 = vadd.f32 %v149, %v267
    %v269 = vpop.f32.mrf.mxu0
    %270 = vmatprep.mubr.f32.mxu0 0.0
    %271 = vmatmul.mubr.f32.gmra.mxu0 %v123
    %v272 = vpop.f32.mrf.mxu0
    %v273 = vadd.f32 %v149, %v272
    %v274 = vpop.f32.mrf.mxu0
    %275 = vmatprep.mubr.f32.mxu0 0.0
    %276 = vmatmul.mubr.f32.gmra.mxu0 %v124
    %v277 = vpop.f32.mrf.mxu0
    %v278 = vadd.f32 %v149, %v277
    %v279 = vpop.f32.mrf.mxu0
    %280 = vmatprep.mubr.f32.mxu0 0.0
    %281 = vmatmul.mubr.f32.gmra.mxu0 %v125
    %v282 = vpop.f32.mrf.mxu0
    %v283 = vadd.f32 %v149, %v282
    %v284 = vpop.f32.mrf.mxu0
    %285 = vmatprep.mubr.f32.mxu0 0.0
    %286 = vmatmul.mubr.f32.gmra.mxu0 %v126
    %v287 = vpop.f32.mrf.mxu0
    %v288 = vadd.f32 %v149, %v287
    %v289 = vpop.f32.mrf.mxu0
    %290 = vmatprep.mubr.f32.mxu0 0.0
    %291 = vmatmul.mubr.f32.gmra.mxu0 %v127
    %v292 = vpop.f32.mrf.mxu0
    %v293 = vadd.f32 %v149, %v292
    %v294 = vpop.f32.mrf.mxu0
    %295 = vdwg.mxu0
    %v296 = vld [vmem:[#allocation2] sm:$0xff]
    %v297 = vld [vmem:[#allocation2 + $0x8] sm:$0xff]
    %v298 = vld [vmem:[#allocation2 + $0x10] sm:$0xff]
    %v299 = vld [vmem:[#allocation2 + $0x18] sm:$0xff]
    %v300 = vld [vmem:[#allocation2 + $0x20] sm:$0xff]
    %v301 = vld [vmem:[#allocation2 + $0x28] sm:$0xff]
    %v302 = vld [vmem:[#allocation2 + $0x30] sm:$0xff]
    %v303 = vld [vmem:[#allocation2 + $0x38] sm:$0xff]
    %v304 = vld [vmem:[#allocation2 + $0x40] sm:$0xff]
    %v305 = vld [vmem:[#allocation2 + $0x48] sm:$0xff]
    %v306 = vld [vmem:[#allocation2 + $0x50] sm:$0xff]
    %v307 = vld [vmem:[#allocation2 + $0x58] sm:$0xff]
    %v308 = vld [vmem:[#allocation2 + $0x60] sm:$0xff]
    %v309 = vld [vmem:[#allocation2 + $0x68] sm:$0xff]
    %v310 = vld [vmem:[#allocation2 + $0x70] sm:$0xff]
    %v311 = vld [vmem:[#allocation2 + $0x78] sm:$0xff]
    %312 = vmax.xlane.f32.xlu0 %v218
    %v313 = vpop.xlane.xlu0 %312
    %314 = vmax.xlane.f32.xlu0 %v223
    %v315 = vpop.xlane.xlu0 %314
    %316 = vmax.xlane.f32.xlu0 %v228
    %v317 = vpop.xlane.xlu0 %316
    %318 = vmax.xlane.f32.xlu0 %v233
    %v319 = vpop.xlane.xlu0 %318
    %320 = vmax.xlane.f32.xlu0 %v238
    %v321 = vpop.xlane.xlu0 %320
    %322 = vmax.xlane.f32.xlu0 %v243
    %v323 = vpop.xlane.xlu0 %322
    %324 = vmax.xlane.f32.xlu0 %v248
    %v325 = vpop.xlane.xlu0 %324
    %326 = vmax.xlane.f32.xlu0 %v253
    %v327 = vpop.xlane.xlu0 %326
    %328 = vmax.xlane.f32.xlu0 %v258
    %v329 = vpop.xlane.xlu0 %328
    %330 = vmax.xlane.f32.xlu0 %v263
    %v331 = vpop.xlane.xlu0 %330
    %332 = vmax.xlane.f32.xlu0 %v268
    %v333 = vpop.xlane.xlu0 %332
    %334 = vmax.xlane.f32.xlu0 %v273
    %v335 = vpop.xlane.xlu0 %334
    %336 = vmax.xlane.f32.xlu0 %v278
    %v337 = vpop.xlane.xlu0 %336
    %338 = vmax.xlane.f32.xlu0 %v283
    %v339 = vpop.xlane.xlu0 %338
    %340 = vmax.xlane.f32.xlu0 %v288
    %v341 = vpop.xlane.xlu0 %340
    %342 = vmax.xlane.f32.xlu0 %v293
    %v343 = vpop.xlane.xlu0 %342
    %v344 = vmax.f32 %v296, %v313
    %v345 = vmax.f32 %v297, %v315
    %v346 = vmax.f32 %v298, %v317
    %v347 = vmax.f32 %v299, %v319
    %v348 = vmax.f32 %v300, %v321
    %v349 = vmax.f32 %v301, %v323
    %v350 = vmax.f32 %v302, %v325
    %v351 = vmax.f32 %v303, %v327
    %v352 = vmax.f32 %v304, %v329
    %v353 = vmax.f32 %v305, %v331
    %v354 = vmax.f32 %v306, %v333
    %v355 = vmax.f32 %v307, %v335
    %v356 = vmax.f32 %v308, %v337
    %v357 = vmax.f32 %v309, %v339
    %v358 = vmax.f32 %v310, %v341
    %v359 = vmax.f32 %v311, %v343
    %v360 = vsub.f32 %v296, %v344
    %v361 = vsub.f32 %v297, %v345
    %v362 = vsub.f32 %v298, %v346
    %v363 = vsub.f32 %v299, %v347
    %v364 = vsub.f32 %v300, %v348
    %v365 = vsub.f32 %v301, %v349
    %v366 = vsub.f32 %v302, %v350
    %v367 = vsub.f32 %v303, %v351
    %v368 = vsub.f32 %v304, %v352
    %v369 = vsub.f32 %v305, %v353
    %v370 = vsub.f32 %v306, %v354
    %v371 = vsub.f32 %v307, %v355
    %v372 = vsub.f32 %v308, %v356
    %v373 = vsub.f32 %v309, %v357
    %v374 = vsub.f32 %v310, %v358
    %v375 = vsub.f32 %v311, %v359
    %v376 = vmul.f32 %v360, 1.442695
    %v377 = vpow.pop %v376
    %v378 = vmul.f32 %v361, 1.442695
    %v379 = vpow.pop %v378
    %v380 = vmul.f32 %v362, 1.442695
    %v381 = vpow.pop %v380
    %v382 = vmul.f32 %v363, 1.442695
    %v383 = vpow.pop %v382
    %v384 = vmul.f32 %v364, 1.442695
    %v385 = vpow.pop %v384
    %v386 = vmul.f32 %v365, 1.442695
    %v387 = vpow.pop %v386
    %v388 = vmul.f32 %v366, 1.442695
    %v389 = vpow.pop %v388
    %v390 = vmul.f32 %v367, 1.442695
    %v391 = vpow.pop %v390
    %v392 = vmul.f32 %v368, 1.442695
    %v393 = vpow.pop %v392
    %v394 = vmul.f32 %v369, 1.442695
    %v395 = vpow.pop %v394
    %v396 = vmul.f32 %v370, 1.442695
    %v397 = vpow.pop %v396
    %v398 = vmul.f32 %v371, 1.442695
    %v399 = vpow.pop %v398
    %v400 = vmul.f32 %v372, 1.442695
    %v401 = vpow.pop %v400
    %v402 = vmul.f32 %v373, 1.442695
    %v403 = vpow.pop %v402
    %v404 = vmul.f32 %v374, 1.442695
    %v405 = vpow.pop %v404
    %v406 = vmul.f32 %v375, 1.442695
    %v407 = vpow.pop %v406
    %409 = vset.pattern.permute.xlu0 0
    %410 = vperm.xlu0 %409, %v344
    %v411 = vpop.permute.xlu0 %410
    %414 = vset.pattern.permute.xlu0 0
    %415 = vperm.xlu0 %414, %v345
    %v416 = vpop.permute.xlu0 %415
    %419 = vset.pattern.permute.xlu0 0
    %420 = vperm.xlu0 %419, %v346
    %v421 = vpop.permute.xlu0 %420
    %424 = vset.pattern.permute.xlu0 0
    %425 = vperm.xlu0 %424, %v347
    %v426 = vpop.permute.xlu0 %425
    %429 = vset.pattern.permute.xlu0 0
    %430 = vperm.xlu0 %429, %v348
    %v431 = vpop.permute.xlu0 %430
    %434 = vset.pattern.permute.xlu0 0
    %435 = vperm.xlu0 %434, %v349
    %v436 = vpop.permute.xlu0 %435
    %439 = vset.pattern.permute.xlu0 0
    %440 = vperm.xlu0 %439, %v350
    %v441 = vpop.permute.xlu0 %440
    %444 = vset.pattern.permute.xlu0 0
    %445 = vperm.xlu0 %444, %v351
    %v446 = vpop.permute.xlu0 %445
    %449 = vset.pattern.permute.xlu0 0
    %450 = vperm.xlu0 %449, %v352
    %v451 = vpop.permute.xlu0 %450
    %454 = vset.pattern.permute.xlu0 0
    %455 = vperm.xlu0 %454, %v353
    %v456 = vpop.permute.xlu0 %455
    %459 = vset.pattern.permute.xlu0 0
    %460 = vperm.xlu0 %459, %v354
    %v461 = vpop.permute.xlu0 %460
    %464 = vset.pattern.permute.xlu0 0
    %465 = vperm.xlu0 %464, %v355
    %v466 = vpop.permute.xlu0 %465
    %469 = vset.pattern.permute.xlu0 0
    %470 = vperm.xlu0 %469, %v356
    %v471 = vpop.permute.xlu0 %470
    %474 = vset.pattern.permute.xlu0 0
    %475 = vperm.xlu0 %474, %v357
    %v476 = vpop.permute.xlu0 %475
    %479 = vset.pattern.permute.xlu0 0
    %480 = vperm.xlu0 %479, %v358
    %v481 = vpop.permute.xlu0 %480
    %484 = vset.pattern.permute.xlu0 0
    %485 = vperm.xlu0 %484, %v359
    %v486 = vpop.permute.xlu0 %485
    %v488 = vsub.f32 %v218, %v411
    %v489 = vsub.f32 %v223, %v416
    %v490 = vsub.f32 %v228, %v421
    %v491 = vsub.f32 %v233, %v426
    %v492 = vsub.f32 %v238, %v431
    %v493 = vsub.f32 %v243, %v436
    %v494 = vsub.f32 %v248, %v441
    %v495 = vsub.f32 %v253, %v446
    %v496 = vsub.f32 %v258, %v451
    %v497 = vsub.f32 %v263, %v456
    %v498 = vsub.f32 %v268, %v461
    %v499 = vsub.f32 %v273, %v466
    %v500 = vsub.f32 %v278, %v471
    %v501 = vsub.f32 %v283, %v476
    %v502 = vsub.f32 %v288, %v481
    %v503 = vsub.f32 %v293, %v486
    %v504 = vmul.f32 %v488, 1.442695
    %v505 = vpow.pop %v504
    %v506 = vmul.f32 %v489, 1.442695
    %v507 = vpow.pop %v506
    %v508 = vmul.f32 %v490, 1.442695
    %v509 = vpow.pop %v508
    %v510 = vmul.f32 %v491, 1.442695
    %v511 = vpow.pop %v510
    %v512 = vmul.f32 %v492, 1.442695
    %v513 = vpow.pop %v512
    %v514 = vmul.f32 %v493, 1.442695
    %v515 = vpow.pop %v514
    %v516 = vmul.f32 %v494, 1.442695
    %v517 = vpow.pop %v516
    %v518 = vmul.f32 %v495, 1.442695
    %v519 = vpow.pop %v518
    %v520 = vmul.f32 %v496, 1.442695
    %v521 = vpow.pop %v520
    %v522 = vmul.f32 %v497, 1.442695
    %v523 = vpow.pop %v522
    %v524 = vmul.f32 %v498, 1.442695
    %v525 = vpow.pop %v524
    %v526 = vmul.f32 %v499, 1.442695
    %v527 = vpow.pop %v526
    %v528 = vmul.f32 %v500, 1.442695
    %v529 = vpow.pop %v528
    %v530 = vmul.f32 %v501, 1.442695
    %v531 = vpow.pop %v530
    %v532 = vmul.f32 %v502, 1.442695
    %v533 = vpow.pop %v532
    %v534 = vmul.f32 %v503, 1.442695
    %v535 = vpow.pop %v534
    %v536 = vld [vmem:[#allocation3] sm:$0xff]
    %v537 = vld [vmem:[#allocation3 + $0x8] sm:$0xff]
    %v538 = vld [vmem:[#allocation3 + $0x10] sm:$0xff]
    %v539 = vld [vmem:[#allocation3 + $0x18] sm:$0xff]
    %v540 = vld [vmem:[#allocation3 + $0x20] sm:$0xff]
    %v541 = vld [vmem:[#allocation3 + $0x28] sm:$0xff]
    %v542 = vld [vmem:[#allocation3 + $0x30] sm:$0xff]
    %v543 = vld [vmem:[#allocation3 + $0x38] sm:$0xff]
    %v544 = vld [vmem:[#allocation3 + $0x40] sm:$0xff]
    %v545 = vld [vmem:[#allocation3 + $0x48] sm:$0xff]
    %v546 = vld [vmem:[#allocation3 + $0x50] sm:$0xff]
    %v547 = vld [vmem:[#allocation3 + $0x58] sm:$0xff]
    %v548 = vld [vmem:[#allocation3 + $0x60] sm:$0xff]
    %v549 = vld [vmem:[#allocation3 + $0x68] sm:$0xff]
    %v550 = vld [vmem:[#allocation3 + $0x70] sm:$0xff]
    %v551 = vld [vmem:[#allocation3 + $0x78] sm:$0xff]
    %v552 = vmul.f32 %v377, %v536
    %v553 = vmul.f32 %v379, %v537
    %v554 = vmul.f32 %v381, %v538
    %v555 = vmul.f32 %v383, %v539
    %v556 = vmul.f32 %v385, %v540
    %v557 = vmul.f32 %v387, %v541
    %v558 = vmul.f32 %v389, %v542
    %v559 = vmul.f32 %v391, %v543
    %v560 = vmul.f32 %v393, %v544
    %v561 = vmul.f32 %v395, %v545
    %v562 = vmul.f32 %v397, %v546
    %v563 = vmul.f32 %v399, %v547
    %v564 = vmul.f32 %v401, %v548
    %v565 = vmul.f32 %v403, %v549
    %v566 = vmul.f32 %v405, %v550
    %v567 = vmul.f32 %v407, %v551
    %568 = vadd.xlane.f32.xlu0 %v505
    %v569 = vpop.xlane.xlu0 %568
    %570 = vadd.xlane.f32.xlu0 %v507
    %v571 = vpop.xlane.xlu0 %570
    %572 = vadd.xlane.f32.xlu0 %v509
    %v573 = vpop.xlane.xlu0 %572
    %574 = vadd.xlane.f32.xlu0 %v511
    %v575 = vpop.xlane.xlu0 %574
    %576 = vadd.xlane.f32.xlu0 %v513
    %v577 = vpop.xlane.xlu0 %576
    %578 = vadd.xlane.f32.xlu0 %v515
    %v579 = vpop.xlane.xlu0 %578
    %580 = vadd.xlane.f32.xlu0 %v517
    %v581 = vpop.xlane.xlu0 %580
    %582 = vadd.xlane.f32.xlu0 %v519
    %v583 = vpop.xlane.xlu0 %582
    %584 = vadd.xlane.f32.xlu0 %v521
    %v585 = vpop.xlane.xlu0 %584
    %586 = vadd.xlane.f32.xlu0 %v523
    %v587 = vpop.xlane.xlu0 %586
    %588 = vadd.xlane.f32.xlu0 %v525
    %v589 = vpop.xlane.xlu0 %588
    %590 = vadd.xlane.f32.xlu0 %v527
    %v591 = vpop.xlane.xlu0 %590
    %592 = vadd.xlane.f32.xlu0 %v529
    %v593 = vpop.xlane.xlu0 %592
    %594 = vadd.xlane.f32.xlu0 %v531
    %v595 = vpop.xlane.xlu0 %594
    %596 = vadd.xlane.f32.xlu0 %v533
    %v597 = vpop.xlane.xlu0 %596
    %598 = vadd.xlane.f32.xlu0 %v535
    %v599 = vpop.xlane.xlu0 %598
    %v600 = vadd.f32 %v552, %v569
    %v601 = vadd.f32 %v553, %v571
    %v602 = vadd.f32 %v554, %v573
    %v603 = vadd.f32 %v555, %v575
    %v604 = vadd.f32 %v556, %v577
    %v605 = vadd.f32 %v557, %v579
    %v606 = vadd.f32 %v558, %v581
    %v607 = vadd.f32 %v559, %v583
    %v608 = vadd.f32 %v560, %v585
    %v609 = vadd.f32 %v561, %v587
    %v610 = vadd.f32 %v562, %v589
    %v611 = vadd.f32 %v563, %v591
    %v612 = vadd.f32 %v564, %v593
    %v613 = vadd.f32 %v565, %v595
    %v614 = vadd.f32 %v566, %v597
    %v615 = vadd.f32 %v567, %v599
    %vm616 = vcmask 7168
    %617 = vst.msk [vmem:[#allocation3] sm:$0xff] %vm616, %v600
    %618 = vst.msk [vmem:[#allocation3 + $0x8] sm:$0xff] %vm616, %v601
    %619 = vst.msk [vmem:[#allocation3 + $0x10] sm:$0xff] %vm616, %v602
    %620 = vst.msk [vmem:[#allocation3 + $0x18] sm:$0xff] %vm616, %v603
    %621 = vst.msk [vmem:[#allocation3 + $0x20] sm:$0xff] %vm616, %v604
    %622 = vst.msk [vmem:[#allocation3 + $0x28] sm:$0xff] %vm616, %v605
    %623 = vst.msk [vmem:[#allocation3 + $0x30] sm:$0xff] %vm616, %v606
    %624 = vst.msk [vmem:[#allocation3 + $0x38] sm:$0xff] %vm616, %v607
    %625 = vst.msk [vmem:[#allocation3 + $0x40] sm:$0xff] %vm616, %v608
    %626 = vst.msk [vmem:[#allocation3 + $0x48] sm:$0xff] %vm616, %v609
    %627 = vst.msk [vmem:[#allocation3 + $0x50] sm:$0xff] %vm616, %v610
    %628 = vst.msk [vmem:[#allocation3 + $0x58] sm:$0xff] %vm616, %v611
    %629 = vst.msk [vmem:[#allocation3 + $0x60] sm:$0xff] %vm616, %v612
    %630 = vst.msk [vmem:[#allocation3 + $0x68] sm:$0xff] %vm616, %v613
    %631 = vst.msk [vmem:[#allocation3 + $0x70] sm:$0xff] %vm616, %v614
    %632 = vst.msk [vmem:[#allocation3 + $0x78] sm:$0xff] %vm616, %v615
    %v633 = vld [vmem:[#allocation4] sm:$0xff]
    %v634 = vld [vmem:[#allocation4 + $0x8] sm:$0xff]
    %v635 = vld [vmem:[#allocation4 + $0x10] sm:$0xff]
    %v636 = vld [vmem:[#allocation4 + $0x18] sm:$0xff]
    %v637 = vld [vmem:[#allocation4 + $0x20] sm:$0xff]
    %v638 = vld [vmem:[#allocation4 + $0x28] sm:$0xff]
    %v639 = vld [vmem:[#allocation4 + $0x30] sm:$0xff]
    %v640 = vld [vmem:[#allocation4 + $0x38] sm:$0xff]
    %v641 = vld [vmem:[#allocation4 + $0x40] sm:$0xff]
    %v642 = vld [vmem:[#allocation4 + $0x48] sm:$0xff]
    %v643 = vld [vmem:[#allocation4 + $0x50] sm:$0xff]
    %v644 = vld [vmem:[#allocation4 + $0x58] sm:$0xff]
    %v645 = vld [vmem:[#allocation4 + $0x60] sm:$0xff]
    %v646 = vld [vmem:[#allocation4 + $0x68] sm:$0xff]
    %v647 = vld [vmem:[#allocation4 + $0x70] sm:$0xff]
    %v648 = vld [vmem:[#allocation4 + $0x78] sm:$0xff]
    %650 = vset.pattern.permute.xlu0 0
    %651 = vperm.xlu0 %650, %v377
    %v652 = vpop.permute.xlu0 %651
    %655 = vset.pattern.permute.xlu0 0
    %656 = vperm.xlu0 %655, %v379
    %v657 = vpop.permute.xlu0 %656
    %660 = vset.pattern.permute.xlu0 0
    %661 = vperm.xlu0 %660, %v381
    %v662 = vpop.permute.xlu0 %661
    %665 = vset.pattern.permute.xlu0 0
    %666 = vperm.xlu0 %665, %v383
    %v667 = vpop.permute.xlu0 %666
    %670 = vset.pattern.permute.xlu0 0
    %671 = vperm.xlu0 %670, %v385
    %v672 = vpop.permute.xlu0 %671
    %675 = vset.pattern.permute.xlu0 0
    %676 = vperm.xlu0 %675, %v387
    %v677 = vpop.permute.xlu0 %676
    %680 = vset.pattern.permute.xlu0 0
    %681 = vperm.xlu0 %680, %v389
    %v682 = vpop.permute.xlu0 %681
    %685 = vset.pattern.permute.xlu0 0
    %686 = vperm.xlu0 %685, %v391
    %v687 = vpop.permute.xlu0 %686
    %690 = vset.pattern.permute.xlu0 0
    %691 = vperm.xlu0 %690, %v393
    %v692 = vpop.permute.xlu0 %691
    %695 = vset.pattern.permute.xlu0 0
    %696 = vperm.xlu0 %695, %v395
    %v697 = vpop.permute.xlu0 %696
    %700 = vset.pattern.permute.xlu0 0
    %701 = vperm.xlu0 %700, %v397
    %v702 = vpop.permute.xlu0 %701
    %705 = vset.pattern.permute.xlu0 0
    %706 = vperm.xlu0 %705, %v399
    %v707 = vpop.permute.xlu0 %706
    %710 = vset.pattern.permute.xlu0 0
    %711 = vperm.xlu0 %710, %v401
    %v712 = vpop.permute.xlu0 %711
    %715 = vset.pattern.permute.xlu0 0
    %716 = vperm.xlu0 %715, %v403
    %v717 = vpop.permute.xlu0 %716
    %720 = vset.pattern.permute.xlu0 0
    %721 = vperm.xlu0 %720, %v405
    %v722 = vpop.permute.xlu0 %721
    %725 = vset.pattern.permute.xlu0 0
    %726 = vperm.xlu0 %725, %v407
    %v727 = vpop.permute.xlu0 %726
    %v729 = vmul.f32 %v652, %v633
    %v730 = vmul.f32 %v657, %v634
    %v731 = vmul.f32 %v662, %v635
    %v732 = vmul.f32 %v667, %v636
    %v733 = vmul.f32 %v672, %v637
    %v734 = vmul.f32 %v677, %v638
    %v735 = vmul.f32 %v682, %v639
    %v736 = vmul.f32 %v687, %v640
    %v737 = vmul.f32 %v692, %v641
    %v738 = vmul.f32 %v697, %v642
    %v739 = vmul.f32 %v702, %v643
    %v740 = vmul.f32 %v707, %v644
    %v741 = vmul.f32 %v712, %v645
    %v742 = vmul.f32 %v717, %v646
    %v743 = vmul.f32 %v722, %v647
    %v744 = vmul.f32 %v727, %v648
    %v745 = vld [vmem:[#allocation10] sm:$0xff]
    %v746 = vld [vmem:[#allocation10 + $0x8] sm:$0xff]
    %v747 = vld [vmem:[#allocation10 + $0x10] sm:$0xff]
    %v748 = vld [vmem:[#allocation10 + $0x18] sm:$0xff]
    %v749 = vld [vmem:[#allocation10 + $0x20] sm:$0xff]
    %v750 = vld [vmem:[#allocation10 + $0x28] sm:$0xff]
    %v751 = vld [vmem:[#allocation10 + $0x30] sm:$0xff]
    %v752 = vld [vmem:[#allocation10 + $0x38] sm:$0xff]
    %v753 = vld [vmem:[#allocation10 + $0x40] sm:$0xff]
    %v754 = vld [vmem:[#allocation10 + $0x48] sm:$0xff]
    %v755 = vld [vmem:[#allocation10 + $0x50] sm:$0xff]
    %v756 = vld [vmem:[#allocation10 + $0x58] sm:$0xff]
    %v757 = vld [vmem:[#allocation10 + $0x60] sm:$0xff]
    %v758 = vld [vmem:[#allocation10 + $0x68] sm:$0xff]
    %v759 = vld [vmem:[#allocation10 + $0x70] sm:$0xff]
    %v760 = vld [vmem:[#allocation10 + $0x78] sm:$0xff]
    %761 = vmatprep.subr.mxu0 0.0
    %762 = vmatpush1.msra.mxu0 %v760
    %763 = vmatprep.subr.mxu0 0.0
    %764 = vmatpush1.msra.mxu0 %v759
    %765 = vmatprep.subr.mxu0 0.0
    %766 = vmatpush1.msra.mxu0 %v758
    %767 = vmatprep.subr.mxu0 0.0
    %768 = vmatpush1.msra.mxu0 %v757
    %769 = vmatprep.subr.mxu0 0.0
    %770 = vmatpush1.msra.mxu0 %v756
    %771 = vmatprep.subr.mxu0 0.0
    %772 = vmatpush1.msra.mxu0 %v755
    %773 = vmatprep.subr.mxu0 0.0
    %774 = vmatpush1.msra.mxu0 %v754
    %775 = vmatprep.subr.mxu0 0.0
    %776 = vmatpush1.msra.mxu0 %v753
    %777 = vmatprep.subr.mxu0 0.0
    %778 = vmatpush1.msra.mxu0 %v752
    %779 = vmatprep.subr.mxu0 0.0
    %780 = vmatpush1.msra.mxu0 %v751
    %781 = vmatprep.subr.mxu0 0.0
    %782 = vmatpush1.msra.mxu0 %v750
    %783 = vmatprep.subr.mxu0 0.0
    %784 = vmatpush1.msra.mxu0 %v749
    %785 = vmatprep.subr.mxu0 0.0
    %786 = vmatpush1.msra.mxu0 %v748
    %787 = vmatprep.subr.mxu0 0.0
    %788 = vmatpush1.msra.mxu0 %v747
    %789 = vmatprep.subr.mxu0 0.0
    %790 = vmatpush1.msra.mxu0 %v746
    %791 = vmatprep.subr.mxu0 0.0
    %792 = vmatpush1.msra.mxu0 %v745
    %793 = vmatprep.subr.mxu0 0.0
    %794 = vmatpush2.msra.mxu0 0.0
    %795 = vmatprep.subr.mxu0 0.0
    %796 = vmatpush2.msra.mxu0 0.0
    %797 = vmatprep.subr.mxu0 0.0
    %798 = vmatpush2.msra.mxu0 0.0
    %799 = vmatprep.subr.mxu0 0.0
    %800 = vmatpush2.msra.mxu0 0.0
    %801 = vmatprep.subr.mxu0 0.0
    %802 = vmatpush2.msra.mxu0 0.0
    %803 = vmatprep.subr.mxu0 0.0
    %804 = vmatpush2.msra.mxu0 0.0
    %805 = vmatprep.subr.mxu0 0.0
    %806 = vmatpush2.msra.mxu0 0.0
    %807 = vmatprep.subr.mxu0 0.0
    %808 = vmatpush2.msra.mxu0 0.0
    %809 = vmatprep.subr.mxu0 0.0
    %810 = vmatpush2.msra.mxu0 0.0
    %811 = vmatprep.subr.mxu0 0.0
    %812 = vmatpush2.msra.mxu0 0.0
    %813 = vmatprep.subr.mxu0 0.0
    %814 = vmatpush2.msra.mxu0 0.0
    %815 = vmatprep.subr.mxu0 0.0
    %816 = vmatpush2.msra.mxu0 0.0
    %817 = vmatprep.subr.mxu0 0.0
    %818 = vmatpush2.msra.mxu0 0.0
    %819 = vmatprep.subr.mxu0 0.0
    %820 = vmatpush2.msra.mxu0 0.0
    %821 = vmatprep.subr.mxu0 0.0
    %822 = vmatpush2.msra.mxu0 0.0
    %823 = vmatprep.subr.mxu0 0.0
    %824 = vmatpush2.msra.mxu0 0.0
    %825 = vmatprep.mubr.f32.mxu0 0.0
    %826 = vmatmul.mubr.f32.gmra.mxu0 %v505
    %v827 = vpop.f32.mrf.mxu0
    %v828 = vadd.f32 0.0, %v827
    %v829 = vpop.f32.mrf.mxu0
    %830 = vmatprep.mubr.f32.mxu0 0.0
    %831 = vmatmul.mubr.f32.gmra.mxu0 %v507
    %v832 = vpop.f32.mrf.mxu0
    %v833 = vadd.f32 0.0, %v832
    %v834 = vpop.f32.mrf.mxu0
    %835 = vmatprep.mubr.f32.mxu0 0.0
    %836 = vmatmul.mubr.f32.gmra.mxu0 %v509
    %v837 = vpop.f32.mrf.mxu0
    %v838 = vadd.f32 0.0, %v837
    %v839 = vpop.f32.mrf.mxu0
    %840 = vmatprep.mubr.f32.mxu0 0.0
    %841 = vmatmul.mubr.f32.gmra.mxu0 %v511
    %v842 = vpop.f32.mrf.mxu0
    %v843 = vadd.f32 0.0, %v842
    %v844 = vpop.f32.mrf.mxu0
    %845 = vmatprep.mubr.f32.mxu0 0.0
    %846 = vmatmul.mubr.f32.gmra.mxu0 %v513
    %v847 = vpop.f32.mrf.mxu0
    %v848 = vadd.f32 0.0, %v847
    %v849 = vpop.f32.mrf.mxu0
    %850 = vmatprep.mubr.f32.mxu0 0.0
    %851 = vmatmul.mubr.f32.gmra.mxu0 %v515
    %v852 = vpop.f32.mrf.mxu0
    %v853 = vadd.f32 0.0, %v852
    %v854 = vpop.f32.mrf.mxu0
    %855 = vmatprep.mubr.f32.mxu0 0.0
    %856 = vmatmul.mubr.f32.gmra.mxu0 %v517
    %v857 = vpop.f32.mrf.mxu0
    %v858 = vadd.f32 0.0, %v857
    %v859 = vpop.f32.mrf.mxu0
    %860 = vmatprep.mubr.f32.mxu0 0.0
    %861 = vmatmul.mubr.f32.gmra.mxu0 %v519
    %v862 = vpop.f32.mrf.mxu0
    %v863 = vadd.f32 0.0, %v862
    %v864 = vpop.f32.mrf.mxu0
    %865 = vmatprep.mubr.f32.mxu0 0.0
    %866 = vmatmul.mubr.f32.gmra.mxu0 %v521
    %v867 = vpop.f32.mrf.mxu0
    %v868 = vadd.f32 0.0, %v867
    %v869 = vpop.f32.mrf.mxu0
    %870 = vmatprep.mubr.f32.mxu0 0.0
    %871 = vmatmul.mubr.f32.gmra.mxu0 %v523
    %v872 = vpop.f32.mrf.mxu0
    %v873 = vadd.f32 0.0, %v872
    %v874 = vpop.f32.mrf.mxu0
    %875 = vmatprep.mubr.f32.mxu0 0.0
    %876 = vmatmul.mubr.f32.gmra.mxu0 %v525
    %v877 = vpop.f32.mrf.mxu0
    %v878 = vadd.f32 0.0, %v877
    %v879 = vpop.f32.mrf.mxu0
    %880 = vmatprep.mubr.f32.mxu0 0.0
    %881 = vmatmul.mubr.f32.gmra.mxu0 %v527
    %v882 = vpop.f32.mrf.mxu0
    %v883 = vadd.f32 0.0, %v882
    %v884 = vpop.f32.mrf.mxu0
    %885 = vmatprep.mubr.f32.mxu0 0.0
    %886 = vmatmul.mubr.f32.gmra.mxu0 %v529
    %v887 = vpop.f32.mrf.mxu0
    %v888 = vadd.f32 0.0, %v887
    %v889 = vpop.f32.mrf.mxu0
    %890 = vmatprep.mubr.f32.mxu0 0.0
    %891 = vmatmul.mubr.f32.gmra.mxu0 %v531
    %v892 = vpop.f32.mrf.mxu0
    %v893 = vadd.f32 0.0, %v892
    %v894 = vpop.f32.mrf.mxu0
    %895 = vmatprep.mubr.f32.mxu0 0.0
    %896 = vmatmul.mubr.f32.gmra.mxu0 %v533
    %v897 = vpop.f32.mrf.mxu0
    %v898 = vadd.f32 0.0, %v897
    %v899 = vpop.f32.mrf.mxu0
    %900 = vmatprep.mubr.f32.mxu0 0.0
    %901 = vmatmul.mubr.f32.gmra.mxu0 %v535
    %v902 = vpop.f32.mrf.mxu0
    %v903 = vadd.f32 0.0, %v902
    %v904 = vpop.f32.mrf.mxu0
    %905 = vdwg.mxu0
    %v906 = vadd.f32 %v729, %v828
    %v907 = vadd.f32 %v730, %v833
    %v908 = vadd.f32 %v731, %v838
    %v909 = vadd.f32 %v732, %v843
    %v910 = vadd.f32 %v733, %v848
    %v911 = vadd.f32 %v734, %v853
    %v912 = vadd.f32 %v735, %v858
    %v913 = vadd.f32 %v736, %v863
    %v914 = vadd.f32 %v737, %v868
    %v915 = vadd.f32 %v738, %v873
    %v916 = vadd.f32 %v739, %v878
    %v917 = vadd.f32 %v740, %v883
    %v918 = vadd.f32 %v741, %v888
    %v919 = vadd.f32 %v742, %v893
    %v920 = vadd.f32 %v743, %v898
    %v921 = vadd.f32 %v744, %v903
    %922 = vst [vmem:[#allocation4] sm:$0xff] %v906
    %923 = vst [vmem:[#allocation4 + $0x8] sm:$0xff] %v907
    %924 = vst [vmem:[#allocation4 + $0x10] sm:$0xff] %v908
    %925 = vst [vmem:[#allocation4 + $0x18] sm:$0xff] %v909
    %926 = vst [vmem:[#allocation4 + $0x20] sm:$0xff] %v910
    %927 = vst [vmem:[#allocation4 + $0x28] sm:$0xff] %v911
    %928 = vst [vmem:[#allocation4 + $0x30] sm:$0xff] %v912
    %929 = vst [vmem:[#allocation4 + $0x38] sm:$0xff] %v913
    %930 = vst [vmem:[#allocation4 + $0x40] sm:$0xff] %v914
    %931 = vst [vmem:[#allocation4 + $0x48] sm:$0xff] %v915
    %932 = vst [vmem:[#allocation4 + $0x50] sm:$0xff] %v916
    %933 = vst [vmem:[#allocation4 + $0x58] sm:$0xff] %v917
    %934 = vst [vmem:[#allocation4 + $0x60] sm:$0xff] %v918
    %935 = vst [vmem:[#allocation4 + $0x68] sm:$0xff] %v919
    %936 = vst [vmem:[#allocation4 + $0x70] sm:$0xff] %v920
    %937 = vst [vmem:[#allocation4 + $0x78] sm:$0xff] %v921
    %938 = vst.msk [vmem:[#allocation2] sm:$0xff] %vm616, %v344
    %939 = vst.msk [vmem:[#allocation2 + $0x8] sm:$0xff] %vm616, %v345
    %940 = vst.msk [vmem:[#allocation2 + $0x10] sm:$0xff] %vm616, %v346
    %941 = vst.msk [vmem:[#allocation2 + $0x18] sm:$0xff] %vm616, %v347
    %942 = vst.msk [vmem:[#allocation2 + $0x20] sm:$0xff] %vm616, %v348
    %943 = vst.msk [vmem:[#allocation2 + $0x28] sm:$0xff] %vm616, %v349
    %944 = vst.msk [vmem:[#allocation2 + $0x30] sm:$0xff] %vm616, %v350
    %945 = vst.msk [vmem:[#allocation2 + $0x38] sm:$0xff] %vm616, %v351
    %946 = vst.msk [vmem:[#allocation2 + $0x40] sm:$0xff] %vm616, %v352
    %947 = vst.msk [vmem:[#allocation2 + $0x48] sm:$0xff] %vm616, %v353
    %948 = vst.msk [vmem:[#allocation2 + $0x50] sm:$0xff] %vm616, %v354
    %949 = vst.msk [vmem:[#allocation2 + $0x58] sm:$0xff] %vm616, %v355
    %950 = vst.msk [vmem:[#allocation2 + $0x60] sm:$0xff] %vm616, %v356
    %951 = vst.msk [vmem:[#allocation2 + $0x68] sm:$0xff] %vm616, %v357
    %952 = vst.msk [vmem:[#allocation2 + $0x70] sm:$0xff] %vm616, %v358
    %953 = vst.msk [vmem:[#allocation2 + $0x78] sm:$0xff] %vm616, %v359
    // Predicated region
    $region34: #{tpu_custom_call.1} parent=1 // pred_check
      %p954 = pneg %p59
    $region35: #{tpu_custom_call.1} parent=1 // pred_check_branch
      %956 = sbr.rel (%p954) target = $region37
    $region36: #{tpu_custom_call.1} parent=1 // pred_region
      %v957 = vld [vmem:[#allocation4] sm:$0xff]
      %v958 = vld [vmem:[#allocation4 + $0x8] sm:$0xff]
      %v959 = vld [vmem:[#allocation4 + $0x10] sm:$0xff]
      %v960 = vld [vmem:[#allocation4 + $0x18] sm:$0xff]
      %v961 = vld [vmem:[#allocation4 + $0x20] sm:$0xff]
      %v962 = vld [vmem:[#allocation4 + $0x28] sm:$0xff]
      %v963 = vld [vmem:[#allocation4 + $0x30] sm:$0xff]
      %v964 = vld [vmem:[#allocation4 + $0x38] sm:$0xff]
      %v965 = vld [vmem:[#allocation4 + $0x40] sm:$0xff]
      %v966 = vld [vmem:[#allocation4 + $0x48] sm:$0xff]
      %v967 = vld [vmem:[#allocation4 + $0x50] sm:$0xff]
      %v968 = vld [vmem:[#allocation4 + $0x58] sm:$0xff]
      %v969 = vld [vmem:[#allocation4 + $0x60] sm:$0xff]
      %v970 = vld [vmem:[#allocation4 + $0x68] sm:$0xff]
      %v971 = vld [vmem:[#allocation4 + $0x70] sm:$0xff]
      %v972 = vld [vmem:[#allocation4 + $0x78] sm:$0xff]
      %v973 = vld [vmem:[#allocation3] sm:$0xff]
      %v974 = vld [vmem:[#allocation3 + $0x8] sm:$0xff]
      %v975 = vld [vmem:[#allocation3 + $0x10] sm:$0xff]
      %v976 = vld [vmem:[#allocation3 + $0x18] sm:$0xff]
      %v977 = vld [vmem:[#allocation3 + $0x20] sm:$0xff]
      %v978 = vld [vmem:[#allocation3 + $0x28] sm:$0xff]
      %v979 = vld [vmem:[#allocation3 + $0x30] sm:$0xff]
      %v980 = vld [vmem:[#allocation3 + $0x38] sm:$0xff]
      %v981 = vld [vmem:[#allocation3 + $0x40] sm:$0xff]
      %v982 = vld [vmem:[#allocation3 + $0x48] sm:$0xff]
      %v983 = vld [vmem:[#allocation3 + $0x50] sm:$0xff]
      %v984 = vld [vmem:[#allocation3 + $0x58] sm:$0xff]
      %v985 = vld [vmem:[#allocation3 + $0x60] sm:$0xff]
      %v986 = vld [vmem:[#allocation3 + $0x68] sm:$0xff]
      %v987 = vld [vmem:[#allocation3 + $0x70] sm:$0xff]
      %v988 = vld [vmem:[#allocation3 + $0x78] sm:$0xff]
      %990 = vset.pattern.permute.xlu0 0
      %991 = vperm.xlu0 %990, %v973
      %v992 = vpop.permute.xlu0 %991
      %995 = vset.pattern.permute.xlu0 0
      %996 = vperm.xlu0 %995, %v974
      %v997 = vpop.permute.xlu0 %996
      %1000 = vset.pattern.permute.xlu0 0
      %1001 = vperm.xlu0 %1000, %v975
      %v1002 = vpop.permute.xlu0 %1001
      %1005 = vset.pattern.permute.xlu0 0
      %1006 = vperm.xlu0 %1005, %v976
      %v1007 = vpop.permute.xlu0 %1006
      %1010 = vset.pattern.permute.xlu0 0
      %1011 = vperm.xlu0 %1010, %v977
      %v1012 = vpop.permute.xlu0 %1011
      %1015 = vset.pattern.permute.xlu0 0
      %1016 = vperm.xlu0 %1015, %v978
      %v1017 = vpop.permute.xlu0 %1016
      %1020 = vset.pattern.permute.xlu0 0
      %1021 = vperm.xlu0 %1020, %v979
      %v1022 = vpop.permute.xlu0 %1021
      %1025 = vset.pattern.permute.xlu0 0
      %1026 = vperm.xlu0 %1025, %v980
      %v1027 = vpop.permute.xlu0 %1026
      %1030 = vset.pattern.permute.xlu0 0
      %1031 = vperm.xlu0 %1030, %v981
      %v1032 = vpop.permute.xlu0 %1031
      %1035 = vset.pattern.permute.xlu0 0
      %1036 = vperm.xlu0 %1035, %v982
      %v1037 = vpop.permute.xlu0 %1036
      %1040 = vset.pattern.permute.xlu0 0
      %1041 = vperm.xlu0 %1040, %v983
      %v1042 = vpop.permute.xlu0 %1041
      %1045 = vset.pattern.permute.xlu0 0
      %1046 = vperm.xlu0 %1045, %v984
      %v1047 = vpop.permute.xlu0 %1046
      %1050 = vset.pattern.permute.xlu0 0
      %1051 = vperm.xlu0 %1050, %v985
      %v1052 = vpop.permute.xlu0 %1051
      %1055 = vset.pattern.permute.xlu0 0
      %1056 = vperm.xlu0 %1055, %v986
      %v1057 = vpop.permute.xlu0 %1056
      %1060 = vset.pattern.permute.xlu0 0
      %1061 = vperm.xlu0 %1060, %v987
      %v1062 = vpop.permute.xlu0 %1061
      %1065 = vset.pattern.permute.xlu0 0
      %1066 = vperm.xlu0 %1065, %v988
      %v1067 = vpop.permute.xlu0 %1066
      %v1069 = vrcp.pop %v992
      %v1070 = vmul.f32 %v957, %v1069
      %v1071 = vrcp.pop %v997
      %v1072 = vmul.f32 %v958, %v1071
      %v1073 = vrcp.pop %v1002
      %v1074 = vmul.f32 %v959, %v1073
      %v1075 = vrcp.pop %v1007
      %v1076 = vmul.f32 %v960, %v1075
      %v1077 = vrcp.pop %v1012
      %v1078 = vmul.f32 %v961, %v1077
      %v1079 = vrcp.pop %v1017
      %v1080 = vmul.f32 %v962, %v1079
      %v1081 = vrcp.pop %v1022
      %v1082 = vmul.f32 %v963, %v1081
      %v1083 = vrcp.pop %v1027
      %v1084 = vmul.f32 %v964, %v1083
      %v1085 = vrcp.pop %v1032
      %v1086 = vmul.f32 %v965, %v1085
      %v1087 = vrcp.pop %v1037
      %v1088 = vmul.f32 %v966, %v1087
      %v1089 = vrcp.pop %v1042
      %v1090 = vmul.f32 %v967, %v1089
      %v1091 = vrcp.pop %v1047
      %v1092 = vmul.f32 %v968, %v1091
      %v1093 = vrcp.pop %v1052
      %v1094 = vmul.f32 %v969, %v1093
      %v1095 = vrcp.pop %v1057
      %v1096 = vmul.f32 %v970, %v1095
      %v1097 = vrcp.pop %v1062
      %v1098 = vmul.f32 %v971, %v1097
      %v1099 = vrcp.pop %v1067
      %v1100 = vmul.f32 %v972, %v1099
      %1101 = vst [vmem:[#allocation11] sm:$0xff] %v1070
      %1102 = vst [vmem:[#allocation11 + $0x8] sm:$0xff] %v1072
      %1103 = vst [vmem:[#allocation11 + $0x10] sm:$0xff] %v1074
      %1104 = vst [vmem:[#allocation11 + $0x18] sm:$0xff] %v1076
      %1105 = vst [vmem:[#allocation11 + $0x20] sm:$0xff] %v1078
      %1106 = vst [vmem:[#allocation11 + $0x28] sm:$0xff] %v1080
      %1107 = vst [vmem:[#allocation11 + $0x30] sm:$0xff] %v1082
      %1108 = vst [vmem:[#allocation11 + $0x38] sm:$0xff] %v1084
      %1109 = vst [vmem:[#allocation11 + $0x40] sm:$0xff] %v1086
      %1110 = vst [vmem:[#allocation11 + $0x48] sm:$0xff] %v1088
      %1111 = vst [vmem:[#allocation11 + $0x50] sm:$0xff] %v1090
      %1112 = vst [vmem:[#allocation11 + $0x58] sm:$0xff] %v1092
      %1113 = vst [vmem:[#allocation11 + $0x60] sm:$0xff] %v1094
      %1114 = vst [vmem:[#allocation11 + $0x68] sm:$0xff] %v1096
      %1115 = vst [vmem:[#allocation11 + $0x70] sm:$0xff] %v1098
      %1116 = vst [vmem:[#allocation11 + $0x78] sm:$0xff] %v1100
    $region37: #{tpu_custom_call.1} parent=1 // pred_fallthru
      _
    // Predicated region
    $region38: #{tpu_custom_call.1} parent=1 // pred_check
      _
    $region39: #{tpu_custom_call.1} parent=1 // pred_check_branch
      %1118 = sbr.rel (0) target = $region41
    $region40: #{tpu_custom_call.1} parent=1 // pred_region
      %s1120 = ssub.s32 2048, 2048
      %1121 = vsyncadd [#allocation7], %s1120
      %s1122 = sshll.u32 [#allocation11], 4
      %s1123 = int_to_ptr.vmem [resolvable:$true] %s1122
      %1128 = dma.vmem_to_hbm [thread:$0]  %s1123, 2048, %s4, [#allocation7], 128, 128, 8
    $region41: #{tpu_custom_call.1} parent=1 // pred_fallthru
      _
    // Predicated region
    $region42: #{tpu_custom_call.1} parent=1 // pred_check
      _
    $region43: #{tpu_custom_call.1} parent=1 // pred_check_branch
      %1130 = sbr.rel (0) target = $region45
    $region44: #{tpu_custom_call.1} parent=1 // pred_region
      %1131 = dma.done [#allocation7], 2048
    $region45: #{tpu_custom_call.1} parent=1 // pred_fallthru
      _
    %1132 = vsyncpa [#allocation6], 1
    %1133 = vsyncpa [#allocation9], 1
    %1134 = vsyncpa [#allocation7], 1

</llo_original>
